<compile_context>
chip_gen: v7x
topology: tpu7x:2x2x1
jax: 0.10.0
libtpu: 0.0.40
codegen_flags: <defaults>
</compile_context>

<pallas_src>
import functools

import jax
import jax.numpy as jnp
from jax.experimental import pallas as pl
from jax.experimental.pallas import tpu as pltpu


def _round_up(x, m):
    return ((x + m - 1) // m) * m


def _vmem_capacity_bytes():
    """Physical VMEM per TensorCore; conservative fallback if the query fails."""
    try:
        info = pltpu.get_tpu_info()
        cap = getattr(info, "vmem_capacity_bytes", None)
        if cap:
            return int(cap)
    except Exception:
        pass
    return 64 * 1024 * 1024  # v7x-sized fallback (safe everywhere)


def _pick_tile_t(T, H, c_pad, x_itemsize, out_itemsize, mxu_itemsize, vmem_budget):
    """Largest sequence tile whose real VMEM footprint fits the budget."""
    def footprint(tile):
        # Double-buffered pipeline buffers for the x tile and the output tile.
        pipeline = 2 * tile * (H * x_itemsize + c_pad * out_itemsize)
        # In-kernel intermediates: x_f32 / xn / y (f32), y cast to MXU dtype,
        # and the f32 matmul accumulator.
        interm = tile * (3 * H * 4 + H * mxu_itemsize + c_pad * 4)
        return pipeline + interm

    if footprint(T) <= vmem_budget:
        return T
    for tile in (2048, 1024, 512, 256, 128, 64, 32, 16, 8):
        if tile < T and footprint(tile) <= vmem_budget:
            return tile
    return 8


def _final_layer_kernel(x_ref, mods_ref, w_ref, b_ref, o_ref, *, eps):
    # x_ref: (1, TILE_T, H); mods_ref: (1, 2, H) = [shift, 1+scale] for this batch row;
    # w_ref: (H, C_pad); b_ref: (1, C_pad); o_ref: (1, TILE_T, C_pad)
    x = x_ref[0].astype(jnp.float32)                       # (TILE_T, H)

    # LayerNorm (no affine), two-pass moments in f32 (avoids E[x^2]-E[x]^2 cancellation).
    mean = jnp.mean(x, axis=-1, keepdims=True)
    d = x - mean
    var = jnp.mean(d * d, axis=-1, keepdims=True)
    xn = d * jax.lax.rsqrt(var + eps)                      # (TILE_T, H)

    mods = mods_ref[0].astype(jnp.float32)                 # (2, H)
    shift = mods[0:1, :]                                   # (1, H)
    scale1 = mods[1:2, :]                                  # (1, H) -- already 1 + scale
    y = xn * scale1 + shift                                # (TILE_T, H)

    # Output linear: MXU-dtype operands, f32 accumulation, f32 bias add.
    out = jnp.dot(y.astype(w_ref.dtype), w_ref[...],
                  preferred_element_type=jnp.float32)      # (TILE_T, C_pad)
    out = out + b_ref[...].astype(jnp.float32)
    o_ref[0] = out.astype(o_ref.dtype)


def prepare_linear_params(w_lin, b_lin, *, mxu_dtype):
    """Transpose + lane-pad the output projection once (hoist out of per-call path)."""
    C_out, H = w_lin.shape
    C_pad = _round_up(C_out, 128)
    w_lin_t = jnp.zeros((H, C_pad), dtype=mxu_dtype).at[:, :C_out].set(
        jnp.transpose(w_lin).astype(mxu_dtype))
    b_lin_p = jnp.zeros((1, C_pad), dtype=jnp.float32).at[:, :C_out].set(
        b_lin.astype(jnp.float32))
    return w_lin_t, b_lin_p


def final_layer_1d(x, c, w_ada, b_ada, w_lin, b_lin, *, eps=1e-6,
                   mxu_dtype=None, tile_t=None, out_dtype=None,
                   prepared=None, return_padded=False):
    """x: (B,T,H), c: (B,H), w_ada: (2H,H), b_ada: (2H,), w_lin: (C_out,H), b_lin: (C_out,)."""
    B, T, H = x.shape
    C_out = w_lin.shape[0]
    C_pad = _round_up(C_out, 128)

    if mxu_dtype is None:
        mxu_dtype = jnp.bfloat16 if x.dtype == jnp.bfloat16 else jnp.float32
    if out_dtype is None:
        out_dtype = x.dtype

    x_itemsize = jnp.dtype(x.dtype).itemsize
    out_itemsize = jnp.dtype(out_dtype).itemsize
    mxu_itemsize = jnp.dtype(mxu_dtype).itemsize

    # ---- adaLN branch hoisted out of the kernel (tiny M=1 matmul, huge weight) ----
    cf = c.astype(jnp.float32)
    silu_c = cf * jax.nn.sigmoid(cf)
    mod = silu_c @ w_ada.astype(jnp.float32).T + b_ada.astype(jnp.float32)   # (B, 2H)
    shift, scale = mod[:, :H], mod[:, H:]
    mods = jnp.stack([shift, 1.0 + scale], axis=1)                           # (B, 2, H) f32

    # ---- output projection weight: transposed + lane-padded (precompute once if possible) ----
    if prepared is None:
        prepared = prepare_linear_params(w_lin, b_lin, mxu_dtype=mxu_dtype)
    w_lin_t, b_lin_p = prepared

    # ---- generation-aware VMEM limit / tile budget ----
    vmem_cap = _vmem_capacity_bytes()                        # 128 MiB v5e/v6e, 64 MiB v7x
    vmem_limit = min(vmem_cap - 8 * 1024 * 1024, 110 * 1024 * 1024)
    resident = (2 * H * C_pad * mxu_itemsize + 2 * C_pad * 4 + 2 * 2 * H * 4)
    tile_budget = max(vmem_limit - resident - 4 * 1024 * 1024, 4 * 1024 * 1024)

    if tile_t is None:
        tile_t = _pick_tile_t(T, H, C_pad, x_itemsize, out_itemsize,
                              mxu_itemsize, tile_budget)
        # v7x megacore: make sure both TensorCores get at least one grid step.
        if B * pl.cdiv(T, tile_t) < 2 and T >= 16:
            tile_t = min(tile_t, _round_up(pl.cdiv(T, 2), 8))

    grid = (B, pl.cdiv(T, tile_t))
    kernel = functools.partial(_final_layer_kernel, eps=eps)

    cost = pl.CostEstimate(
        flops=2 * B * T * H * C_pad,
        transcendentals=B * T,                               # rsqrt per row
        bytes_accessed=(B * T * H * x_itemsize
                        + B * 2 * H * 4
                        + H * C_pad * mxu_itemsize + C_pad * 4
                        + B * T * C_pad * out_itemsize),
    )

    out = pl.pallas_call(
        kernel,
        out_shape=jax.ShapeDtypeStruct((B, T, C_pad), out_dtype),
        grid=grid,
        in_specs=[
            pl.BlockSpec((1, tile_t, H), lambda b, t: (b, t, 0)),   # x tile
            pl.BlockSpec((1, 2, H), lambda b, t: (b, 0, 0)),        # [shift, 1+scale]
            pl.BlockSpec((H, C_pad), lambda b, t: (0, 0)),          # W_lin^T (resident)
            pl.BlockSpec((1, C_pad), lambda b, t: (0, 0)),          # b_lin (resident)
        ],
        out_specs=pl.BlockSpec((1, tile_t, C_pad), lambda b, t: (b, t, 0)),
        compiler_params=pltpu.CompilerParams(
            dimension_semantics=("parallel", "parallel"),
            vmem_limit_bytes=vmem_limit,
        ),
        cost_estimate=cost,
    )(x, mods, w_lin_t, b_lin_p)

    if return_padded:
        # Consumer takes the lane-padded (B, T, C_pad) layout; first C_out lanes valid.
        return out
    return out[..., :C_out]


def _reference(x, c, w_ada, b_ada, w_lin, b_lin, eps=1e-6):
    silu_c = c * jax.nn.sigmoid(c)
    mod = silu_c @ w_ada.T + b_ada
    H = x.shape[-1]
    shift, scale = mod[:, :H], mod[:, H:]
    mean = jnp.mean(x, axis=-1, keepdims=True)
    var = jnp.mean((x - mean) ** 2, axis=-1, keepdims=True)
    xn = (x - mean) * jax.lax.rsqrt(var + eps)
    y = xn * (1 + scale[:, None, :]) + shift[:, None, :]
    return y @ w_lin.T + b_lin


if __name__ == "__main__":
    B, T, H, C_out = 2, 8, 32, 16

    key = jax.random.PRNGKey(0)
    kx, kc, kwa, kba, kwl, kbl = jax.random.split(key, 6)

    x = jax.random.normal(kx, (B, T, H), dtype=jnp.float32)
    c = jax.random.normal(kc, (B, H), dtype=jnp.float32)

    # Deterministic synthetic parameters (shapes follow the nn.Module __init__).
    w_ada = jax.random.normal(kwa, (2 * H, H), dtype=jnp.float32) * (1.0 / jnp.sqrt(H))
    b_ada = jax.random.normal(kba, (2 * H,), dtype=jnp.float32) * 0.01
    w_lin = jax.random.normal(kwl, (C_out, H), dtype=jnp.float32) * (1.0 / jnp.sqrt(H))
    b_lin = jax.random.normal(kbl, (C_out,), dtype=jnp.float32) * 0.01

    ref = _reference(x, c, w_ada, b_ada, w_lin, b_lin)

    # f32 activations -> f32 MXU path: tight numerical check against the reference.
    out_f32 = jax.block_until_ready(final_layer_1d(x, c, w_ada, b_ada, w_lin, b_lin))
    assert out_f32.shape == (B, T, C_out)
    assert out_f32.dtype == jnp.float32
    assert jnp.allclose(out_f32, ref, atol=1e-4, rtol=1e-4), "f32 path mismatch vs reference"

    # bf16 activation stream (halves the dominant HBM read and the padded write);
    # LN stats still in f32 inside the kernel.  Compare against the same-precision input.
    x_bf16 = x.astype(jnp.bfloat16)
    ref_bf16_in = _reference(x_bf16.astype(jnp.float32), c, w_ada, b_ada, w_lin, b_lin)
    out_bf16 = jax.block_until_ready(
        final_layer_1d(x_bf16, c, w_ada, b_ada, w_lin, b_lin))
    assert out_bf16.shape == (B, T, C_out)
    assert out_bf16.dtype == jnp.bfloat16
    assert jnp.allclose(out_bf16.astype(jnp.float32), ref_bf16_in,
                        atol=1e-1, rtol=1e-1), "bf16 path mismatch vs reference"

    print("KERNEL_OK")
</pallas_src>

<mosaic_0001>
module attributes {stable_mosaic.version = 11 : i64} {
  func.func @_final_layer_kernel(%arg0: i32, %arg1: i32, %arg2: memref<1x8x32xf32, #tpu.memory_space<vmem>>, %arg3: memref<1x2x32xf32, #tpu.memory_space<vmem>>, %arg4: memref<32x128xf32, #tpu.memory_space<vmem>>, %arg5: memref<1x128xf32, #tpu.memory_space<vmem>>, %arg6: memref<1x8x128xf32, #tpu.memory_space<vmem>>) attributes {dimension_semantics = [#tpu.dimension_semantics<parallel>, #tpu.dimension_semantics<parallel>], iteration_bounds = array<i64: 2, 1>, scalar_prefetch = 0 : i64, scratch_operands = 0 : i64, tpu.core_type = #tpu.core_type<tc>, window_params = [{transform_indices = @transform_0, window_bounds = array<i64: 1, 8, 32>}, {transform_indices = @transform_1, window_bounds = array<i64: 1, 2, 32>}, {pipeline_mode = #tpu.pipeline_mode<synchronous>, transform_indices = @transform_2, window_bounds = array<i64: 32, 128>}, {pipeline_mode = #tpu.pipeline_mode<synchronous>, transform_indices = @transform_3, window_bounds = array<i64: 1, 128>}, {transform_indices = @transform_4, window_bounds = array<i64: 1, 8, 128>}]} {
    %c0 = arith.constant 0 : index
    %c0_0 = arith.constant 0 : index
    %c0_1 = arith.constant 0 : index
    %0 = vector.load %arg2[%c0, %c0_0, %c0_1] : memref<1x8x32xf32, #tpu.memory_space<vmem>>, vector<1x8x32xf32>
    %1 = vector.shape_cast %0 : vector<1x8x32xf32> to vector<8x32xf32>
    %cst = arith.constant dense<0.000000e+00> : vector<8xf32>
    %2 = vector.multi_reduction <add>, %1, %cst [1] : vector<8x32xf32> to vector<8xf32>
    %3 = vector.shape_cast %2 : vector<8xf32> to vector<8x1xf32>
    %cst_2 = arith.constant 3.200000e+01 : f32
    %4 = vector.broadcast %cst_2 : f32 to vector<8x1xf32>
    %5 = arith.divf %3, %4 : vector<8x1xf32>
    %6 = vector.broadcast %5 : vector<8x1xf32> to vector<8x32xf32>
    %7 = arith.subf %1, %6 : vector<8x32xf32>
    %8 = arith.mulf %7, %7 : vector<8x32xf32>
    %cst_3 = arith.constant dense<0.000000e+00> : vector<8xf32>
    %9 = vector.multi_reduction <add>, %8, %cst_3 [1] : vector<8x32xf32> to vector<8xf32>
    %10 = vector.shape_cast %9 : vector<8xf32> to vector<8x1xf32>
    %cst_4 = arith.constant 3.200000e+01 : f32
    %11 = vector.broadcast %cst_4 : f32 to vector<8x1xf32>
    %12 = arith.divf %10, %11 : vector<8x1xf32>
    %cst_5 = arith.constant 9.99999997E-7 : f32
    %13 = vector.broadcast %cst_5 : f32 to vector<8x1xf32>
    %14 = arith.addf %12, %13 : vector<8x1xf32>
    %15 = math.rsqrt %14 : vector<8x1xf32>
    %16 = vector.broadcast %15 : vector<8x1xf32> to vector<8x32xf32>
    %17 = arith.mulf %7, %16 : vector<8x32xf32>
    %c0_6 = arith.constant 0 : index
    %c0_7 = arith.constant 0 : index
    %c0_8 = arith.constant 0 : index
    %18 = vector.load %arg3[%c0_6, %c0_7, %c0_8] : memref<1x2x32xf32, #tpu.memory_space<vmem>>, vector<1x2x32xf32>
    %19 = vector.shape_cast %18 : vector<1x2x32xf32> to vector<2x32xf32>
    %20 = vector.extract_strided_slice %19 {offsets = [0, 0], sizes = [1, 32], strides = [1, 1]} : vector<2x32xf32> to vector<1x32xf32>
    %21 = vector.extract_strided_slice %19 {offsets = [1, 0], sizes = [1, 32], strides = [1, 1]} : vector<2x32xf32> to vector<1x32xf32>
    %22 = vector.broadcast %21 : vector<1x32xf32> to vector<8x32xf32>
    %23 = arith.mulf %17, %22 : vector<8x32xf32>
    %24 = vector.broadcast %20 : vector<1x32xf32> to vector<8x32xf32>
    %25 = arith.addf %23, %24 : vector<8x32xf32>
    %c0_9 = arith.constant 0 : index
    %c0_10 = arith.constant 0 : index
    %26 = vector.load %arg4[%c0_9, %c0_10] : memref<32x128xf32, #tpu.memory_space<vmem>>, vector<32x128xf32>
    %cst_11 = arith.constant dense<0.000000e+00> : vector<8x128xf32>
    %27 = tpu.matmul %25, %26, %cst_11 {dimension_numbers = #tpu.dot_dimension_numbers<[1], [0], [0], [1], [0, 0, 1, 1], [], []>} : vector<8x32xf32>, vector<32x128xf32>, vector<8x128xf32> -> vector<8x128xf32>
    %c0_12 = arith.constant 0 : index
    %c0_13 = arith.constant 0 : index
    %28 = vector.load %arg5[%c0_12, %c0_13] : memref<1x128xf32, #tpu.memory_space<vmem>>, vector<1x128xf32>
    %29 = vector.broadcast %28 : vector<1x128xf32> to vector<8x128xf32>
    %30 = arith.addf %27, %29 : vector<8x128xf32>
    %c0_14 = arith.constant 0 : index
    %c0_15 = arith.constant 0 : index
    %c0_16 = arith.constant 0 : index
    %31 = vector.load %arg6[%c0_14, %c0_15, %c0_16] : memref<1x8x128xf32, #tpu.memory_space<vmem>>, vector<1x8x128xf32>
    %32 = vector.shape_cast %31 : vector<1x8x128xf32> to vector<8x128xf32>
    %33 = vector.shape_cast %30 : vector<8x128xf32> to vector<1x8x128xf32>
    tpu.vector_store %arg6[%c0_14, %c0_15, %c0_16], %33 {strides = array<i32>} : memref<1x8x128xf32, #tpu.memory_space<vmem>>, vector<1x8x128xf32>,
    return
  }
  func.func @transform_0(%arg0: i32, %arg1: i32) -> (i32, i32, i32) {
    %c0_i32 = arith.constant 0 : i32
    %c0_i32_0 = arith.constant 0 : i32
    return %arg0, %arg1, %c0_i32 : i32, i32, i32
  }
  func.func @transform_1(%arg0: i32, %arg1: i32) -> (i32, i32, i32) {
    %c0_i32 = arith.constant 0 : i32
    %c0_i32_0 = arith.constant 0 : i32
    %c0_i32_1 = arith.constant 0 : i32
    return %arg0, %c0_i32, %c0_i32_0 : i32, i32, i32
  }
  func.func @transform_2(%arg0: i32, %arg1: i32) -> (i32, i32) {
    %c0_i32 = arith.constant 0 : i32
    %c0_i32_0 = arith.constant 0 : i32
    %c0_i32_1 = arith.constant 0 : i32
    return %c0_i32, %c0_i32_0 : i32, i32
  }
  func.func @transform_3(%arg0: i32, %arg1: i32) -> (i32, i32) {
    %c0_i32 = arith.constant 0 : i32
    %c0_i32_0 = arith.constant 0 : i32
    %c0_i32_1 = arith.constant 0 : i32
    return %c0_i32, %c0_i32_0 : i32, i32
  }
  func.func @transform_4(%arg0: i32, %arg1: i32) -> (i32, i32, i32) {
    %c0_i32 = arith.constant 0 : i32
    %c0_i32_0 = arith.constant 0 : i32
    return %arg0, %arg1, %c0_i32 : i32, i32, i32
  }
}

</mosaic_0001>

<llo_original>
// kernel: tpu_custom_call.1
$region0: #{tpu_custom_call.1}
  #allocation0 [shape = 'u32[]', space=smem, size = 0x4, offset = 0x4, fixed_abs, tag = 'smem constant byte address 0x4 - core index']
  #allocation1 [shape = 'u32[144,128]{1,0:T(1,128)}', space=vmem, size = 0x12000, scoped, tag = 'internal scratch']
  %s0 = inlined_call_operand.hbm [shape: f32[2,8,32], index: 0, kind: input, shape index: {}]
  %s1 = inlined_call_operand.hbm [shape: f32[2,2,32], index: 1, kind: input, shape index: {}]
  %s2 = inlined_call_operand.hbm [shape: f32[32,128], index: 2, kind: input, shape index: {}]
  %s3 = inlined_call_operand.vmem [shape: f32[1,128], index: 3, kind: input, shape index: {}]
  %s4 = inlined_call_operand.hbm [shape: f32[2,8,128], index: 4, kind: output, shape index: {}]
  %s5 = sld [smem:[#allocation0]]
  $region61: #{tpu_custom_call.1} parent=0
    _
  %s7 = ssub.s32 1, %s5
  %s8 = scalar_select 0, %s7, %s5
  $region1: #{tpu_custom_call.1} parent=0
    #allocation2 [shape = 'u8[8192]{0}', space=vmem, size = 0x2000, scoped, tag = 'input window, operand 0']
    #allocation3 [shape = 's32[2]{0}', space=sflag, size = 0x8, scoped, tag = 'scoped memory for tpu_custom_call.1']
    #allocation4 [shape = 's32[2]{0}', space=sflag, size = 0x8, scoped, tag = 'scoped memory for tpu_custom_call.1']
    #allocation5 [shape = 'u8[2048]{0}', space=vmem, size = 0x800, scoped, tag = 'input window, operand 1']
    #allocation6 [shape = 's32[2]{0}', space=sflag, size = 0x8, scoped, tag = 'scoped memory for tpu_custom_call.1']
    #allocation7 [shape = 'u8[16384]{0}', space=vmem, size = 0x4000, scoped, tag = 'input window, operand 2, single buffered']
    #allocation8 [shape = 'u8[8192]{0}', space=vmem, size = 0x2000, scoped, tag = 'output window, operand 0']
    %9 = vsyncpa [#allocation3], 0
    %s10 = scalar_lea.sflag [#allocation3], 1
    %11 = vsyncpa %s10, 0
    %12 = vsyncpa [#allocation6], 0
    %s13 = scalar_lea.sflag [#allocation6], 1
    %14 = vsyncpa %s13, 0
    %15 = vsyncpa [#allocation4], 0
    %s16 = scalar_lea.sflag [#allocation4], 1
    %17 = vsyncpa %s16, 0
    loop: start=0, step=1, limit=4
    $region2: #{tpu_custom_call.1} parent=1 // loop_pre_header
      _
    $region3: #{tpu_custom_call.1} parent=1 // loop_header
      %s19 = sphi 0, %s23
      %p20 = scmp.ge.s32.totalorder %s19, 4
      %s26 = sphi 0, %s38
      %s27 = sphi 0, %s34
      %s28 = sphi 0, %s26
      %s29 = sphi 0, %s27
      %s30 = sphi 0, %s28
      %s31 = sphi 0, %s29
      %s43 = sphi 0, %s45
      %s46 = sphi 0, %s43
      %s47 = sphi 0, %s46
      %s63 = sphi 0, %s47
      %s69 = sphi 0, %s71
      %s72 = sphi 0, %s69
      %s73 = sphi 0, %s72
      %s89 = sphi 0, %s73
      %s93 = sphi 0, %s93
      %s95 = sphi 0, %s93
      %s96 = sphi 0, %s95
      %s110 = sphi 0, %s96
      %s114 = sphi 0, %s114
      %s116 = sphi 0, %s114
      %s117 = sphi 0, %s116
      %s131 = sphi 0, %s117
      %s139 = sphi 0, %s141
      %s142 = sphi 0, %s139
      %s143 = sphi 0, %s142
      %s159 = sphi 0, %s143
    $region4: #{tpu_custom_call.1} parent=1 // loop_header_branch
      %22 = sbr.rel (%p20) target = $region8
    $region5: #{tpu_custom_call.1} parent=1 // loop_body
      %s24 = ssub.s32 %s19, 1
      %s25 = ssub.s32 %s19, 2
      %s32 = sadd.s32 1, %s27
      %p33 = scmp.ge.s32.totalorder %s32, 1
      %s34 = scalar_select %p33, 0, %s32
      %s35 = sadd.s32 1, %s26
      %s36 = scalar_select %p33, %s35, %s26
      %p37 = scmp.ge.s32.totalorder %s36, 2
      %s38 = scalar_select %p37, 0, %s36
      %s39 = ssub.s32 %s26, %s38
      %s40 = ssub.s32 %s27, %s34
      %s41 = sor.u32 %s39, %s40
      %p42 = scmp.eq.s32.totalorder %s41, 0
      %s44 = sadd.s32 %s43, 1
      %s45 = scalar_select %p42, %s43, %s44
      %p48 = pneg %p42
      %p49 = scmp.eq.s32.totalorder %s19, 1
      %p50 = por %p48, %p49
      %p51 = scmp.ne.s32.totalorder %s43, %s46
      %p52 = scmp.eq.s32.totalorder %s19, 0
      %p53 = por %p51, %p52
      %p54 = scmp.ne.s32.totalorder %s43, %s46
      %p55 = scmp.eq.s32.totalorder %s24, 1
      %p56 = por %p54, %p55
      %p57 = scmp.ne.s32.totalorder %s46, %s47
      %p58 = scmp.eq.s32.totalorder %s24, 0
      %p59 = por %p57, %p58
      %p60 = scmp.ne.s32.totalorder %s46, %s47
      %p61 = scmp.eq.s32.totalorder %s25, 1
      %p62 = por %p60, %p61
      %p64 = scmp.ne.s32.totalorder %s47, %s63
      %p65 = scmp.eq.s32.totalorder %s25, 0
      %p66 = por %p64, %p65
      %s67 = ssub.s32 %s26, %s38
      %p68 = scmp.eq.s32.totalorder %s67, 0
      %s70 = sadd.s32 %s69, 1
      %s71 = scalar_select %p68, %s69, %s70
      %p74 = pneg %p68
      %p75 = scmp.eq.s32.totalorder %s19, 1
      %p76 = por %p74, %p75
      %p77 = scmp.ne.s32.totalorder %s69, %s72
      %p78 = scmp.eq.s32.totalorder %s19, 0
      %p79 = por %p77, %p78
      %p80 = scmp.ne.s32.totalorder %s69, %s72
      %p81 = scmp.eq.s32.totalorder %s24, 1
      %p82 = por %p80, %p81
      %p83 = scmp.ne.s32.totalorder %s72, %s73
      %p84 = scmp.eq.s32.totalorder %s24, 0
      %p85 = por %p83, %p84
      %p86 = scmp.ne.s32.totalorder %s72, %s73
      %p87 = scmp.eq.s32.totalorder %s25, 1
      %p88 = por %p86, %p87
      %p90 = scmp.ne.s32.totalorder %s73, %s89
      %p91 = scmp.eq.s32.totalorder %s25, 0
      %p92 = por %p90, %p91
      %s94 = sadd.s32 %s93, 1
      %p97 = scmp.eq.s32.totalorder %s19, 1
      %p98 = scmp.ne.s32.totalorder %s93, %s95
      %p99 = scmp.eq.s32.totalorder %s19, 0
      %p100 = por %p98, %p99
      %p101 = scmp.ne.s32.totalorder %s93, %s95
      %p102 = scmp.eq.s32.totalorder %s24, 1
      %p103 = por %p101, %p102
      %p104 = scmp.ne.s32.totalorder %s95, %s96
      %p105 = scmp.eq.s32.totalorder %s24, 0
      %p106 = por %p104, %p105
      %p107 = scmp.ne.s32.totalorder %s95, %s96
      %p108 = scmp.eq.s32.totalorder %s25, 1
      %p109 = por %p107, %p108
      %p111 = scmp.ne.s32.totalorder %s96, %s110
      %p112 = scmp.eq.s32.totalorder %s25, 0
      %p113 = por %p111, %p112
      %s115 = sadd.s32 %s114, 1
      %p118 = scmp.eq.s32.totalorder %s19, 1
      %p119 = scmp.ne.s32.totalorder %s114, %s116
      %p120 = scmp.eq.s32.totalorder %s19, 0
      %p121 = por %p119, %p120
      %p122 = scmp.ne.s32.totalorder %s114, %s116
      %p123 = scmp.eq.s32.totalorder %s24, 1
      %p124 = por %p122, %p123
      %p125 = scmp.ne.s32.totalorder %s116, %s117
      %p126 = scmp.eq.s32.totalorder %s24, 0
      %p127 = por %p125, %p126
      %p128 = scmp.ne.s32.totalorder %s116, %s117
      %p129 = scmp.eq.s32.totalorder %s25, 1
      %p130 = por %p128, %p129
      %p132 = scmp.ne.s32.totalorder %s117, %s131
      %p133 = scmp.eq.s32.totalorder %s25, 0
      %p134 = por %p132, %p133
      %s135 = ssub.s32 %s26, %s38
      %s136 = ssub.s32 %s27, %s34
      %s137 = sor.u32 %s135, %s136
      %p138 = scmp.eq.s32.totalorder %s137, 0
      %s140 = sadd.s32 %s139, 1
      %s141 = scalar_select %p138, %s139, %s140
      %p144 = pneg %p138
      %p145 = scmp.eq.s32.totalorder %s19, 1
      %p146 = por %p144, %p145
      %p147 = scmp.ne.s32.totalorder %s139, %s142
      %p148 = scmp.eq.s32.totalorder %s19, 0
      %p149 = por %p147, %p148
      %p150 = scmp.ne.s32.totalorder %s139, %s142
      %p151 = scmp.eq.s32.totalorder %s24, 1
      %p152 = por %p150, %p151
      %p153 = scmp.ne.s32.totalorder %s142, %s143
      %p154 = scmp.eq.s32.totalorder %s24, 0
      %p155 = por %p153, %p154
      %p156 = scmp.ne.s32.totalorder %s142, %s143
      %p157 = scmp.eq.s32.totalorder %s25, 1
      %p158 = por %p156, %p157
      %p160 = scmp.ne.s32.totalorder %s143, %s159
      %p161 = scmp.eq.s32.totalorder %s25, 0
      %p162 = por %p160, %p161
      %p163 = scmp.le.s32.totalorder 1, %s19
      %p164 = scmp.lt.s32.totalorder %s19, 3
      %p165 = pnand %p163, %p164
      %p166 = pneg %p165
      // Predicated region
      $region9: #{tpu_custom_call.1} parent=5 // pred_check
        _
      $region10: #{tpu_custom_call.1} parent=5 // pred_check_branch
        %168 = sbr.rel (%p165) target = $region12
      $region11: #{tpu_custom_call.1} parent=5 // pred_region
        %s169 = ssub.s32 %s19, 1
        // Predicated region
        $region13: #{tpu_custom_call.1} parent=11 // pred_check
          %p170 = pneg %p106
        $region14: #{tpu_custom_call.1} parent=11 // pred_check_branch
          %172 = sbr.rel (%p170) target = $region16
        $region15: #{tpu_custom_call.1} parent=11 // pred_region
          %s174 = ssub.s32 512, 512
          %175 = vsyncadd [#allocation6], %s174
          %s176 = sshll.u32 [#allocation7], 4
          %s177 = int_to_ptr.vmem [resolvable:$true] %s176
          %182 = dma.hbm_to_vmem [thread:$0]  %s2, 512, %s177, [#allocation6], 128, 128, 8
        $region16: #{tpu_custom_call.1} parent=11 // pred_fallthru
          _
        // Predicated region
        $region17: #{tpu_custom_call.1} parent=11 // pred_check
          %p183 = pneg %p127
        $region18: #{tpu_custom_call.1} parent=11 // pred_check_branch
          %185 = sbr.rel (%p183) target = $region20
        $region19: #{tpu_custom_call.1} parent=11 // pred_region
          _
        $region20: #{tpu_custom_call.1} parent=11 // pred_fallthru
          _
      $region12: #{tpu_custom_call.1} parent=5 // pred_fallthru
        _
      %p186 = scmp.lt.s32.totalorder %s19, 2
      // Predicated region
      $region21: #{tpu_custom_call.1} parent=5 // pred_check
        %p187 = pneg %p186
      $region22: #{tpu_custom_call.1} parent=5 // pred_check_branch
        %189 = sbr.rel (%p187) target = $region24
      $region23: #{tpu_custom_call.1} parent=5 // pred_region
        // Predicated region
        $region25: #{tpu_custom_call.1} parent=23 // pred_check
          %p190 = pneg %p53
        $region26: #{tpu_custom_call.1} parent=23 // pred_check_branch
          %192 = sbr.rel (%p190) target = $region28
        $region27: #{tpu_custom_call.1} parent=23 // pred_region
          %s193 = sand.u32 %s43, 1
          %s194 = scalar_lea.sflag [#allocation3], %s193
          %s195 = sand.u32 %s43, 1
          %s196 = smul.addr %s195, 8
          %s197 = scalar_lea.vmem [#allocation2], %s196
          %s199 = ssub.s32 128, 128
          %200 = vsyncadd %s194, %s199
          %s201 = sadd.s32 %s27, %s26
          %s202 = smul.addr %s201, 128
          %s203 = scalar_lea.hbm %s0, %s202
          %s205 = sshll.u32 %s197, 4
          %s206 = int_to_ptr.vmem [resolvable:$true] %s205
          %208 = dma.hbm_to_vmem [thread:$0]  %s203, 128, %s206, %s194
        $region28: #{tpu_custom_call.1} parent=23 // pred_fallthru
          _
        // Predicated region
        $region29: #{tpu_custom_call.1} parent=23 // pred_check
          %p209 = pneg %p79
        $region30: #{tpu_custom_call.1} parent=23 // pred_check_branch
          %211 = sbr.rel (%p209) target = $region32
        $region31: #{tpu_custom_call.1} parent=23 // pred_region
          %s212 = sand.u32 %s19, 1
          %s213 = scalar_lea.sflag [#allocation6], %s212
          %s214 = sand.u32 %s69, 1
          %s215 = smul.addr %s214, 2
          %s216 = scalar_lea.vmem [#allocation5], %s215
          %s218 = ssub.s32 32, 32
          %219 = vsyncadd %s213, %s218
          %s220 = smul.addr %s26, 32
          %s221 = scalar_lea.hbm %s1, %s220
          %s223 = sshll.u32 %s216, 4
          %s224 = int_to_ptr.vmem [resolvable:$true] %s223
          %226 = dma.hbm_to_vmem [thread:$0]  %s221, 32, %s224, %s213
        $region32: #{tpu_custom_call.1} parent=23 // pred_fallthru
          _
      $region24: #{tpu_custom_call.1} parent=5 // pred_fallthru
        _
      %p227 = scmp.le.s32.totalorder 1, %s19
      %p228 = scmp.lt.s32.totalorder %s19, 3
      %p229 = pnand %p227, %p228
      %p230 = pneg %p229
      // Predicated region
      $region33: #{tpu_custom_call.1} parent=5 // pred_check
        _
      $region34: #{tpu_custom_call.1} parent=5 // pred_check_branch
        %232 = sbr.rel (%p229) target = $region36
      $region35: #{tpu_custom_call.1} parent=5 // pred_region
        %s233 = ssub.s32 %s19, 1
        %s234 = sand.u32 %s46, 1
        %s235 = scalar_lea.sflag [#allocation3], %s234
        %s236 = sand.u32 %s46, 1
        %s237 = smul.addr %s236, 8
        %s238 = scalar_lea.vmem [#allocation2], %s237
        // Predicated region
        $region37: #{tpu_custom_call.1} parent=35 // pred_check
          %p239 = pneg %p59
        $region38: #{tpu_custom_call.1} parent=35 // pred_check_branch
          %241 = sbr.rel (%p239) target = $region40
        $region39: #{tpu_custom_call.1} parent=35 // pred_region
          %242 = dma.done %s235, 128
        $region40: #{tpu_custom_call.1} parent=35 // pred_fallthru
          _
        %s243 = sand.u32 %s24, 1
        %s244 = scalar_lea.sflag [#allocation6], %s243
        %s245 = sand.u32 %s72, 1
        %s246 = smul.addr %s245, 2
        %s247 = scalar_lea.vmem [#allocation5], %s246
        // Predicated region
        $region41: #{tpu_custom_call.1} parent=35 // pred_check
          %p248 = pneg %p85
        $region42: #{tpu_custom_call.1} parent=35 // pred_check_branch
          %250 = sbr.rel (%p248) target = $region44
        $region43: #{tpu_custom_call.1} parent=35 // pred_region
          %251 = dma.done %s244, 32
        $region44: #{tpu_custom_call.1} parent=35 // pred_fallthru
          _
        // Predicated region
        $region45: #{tpu_custom_call.1} parent=35 // pred_check
          %p252 = pneg %p106
        $region46: #{tpu_custom_call.1} parent=35 // pred_check_branch
          %254 = sbr.rel (%p252) target = $region48
        $region47: #{tpu_custom_call.1} parent=35 // pred_region
          %255 = dma.done [#allocation6], 512
        $region48: #{tpu_custom_call.1} parent=35 // pred_fallthru
          _
        %s256 = sand.u32 %s46, 1
        %s257 = scalar_lea.sflag [#allocation3], %s256
        %s258 = sand.u32 %s46, 1
        %s259 = smul.addr %s258, 8
        %s260 = scalar_lea.vmem [#allocation2], %s259
        %p261 = pneg %p59
        %p262 = pneg %p56
        %s263 = sand.u32 %s24, 1
        %s264 = scalar_lea.sflag [#allocation6], %s263
        %s265 = sand.u32 %s72, 1
        %s266 = smul.addr %s265, 2
        %s267 = scalar_lea.vmem [#allocation5], %s266
        %p268 = pneg %p85
        %p269 = pneg %p82
        %p270 = pneg %p106
        %p271 = pneg %p103
        %p272 = pneg %p127
        %p273 = pneg %p124
        %p274 = pneg %p155
        %p275 = pneg %p152
        %s276 = sand.u32 %s142, 1
        %s277 = scalar_lea.sflag [#allocation4], %s276
        %s278 = sand.u32 %s142, 1
        %s279 = smul.addr %s278, 8
        %s280 = scalar_lea.vmem [#allocation8], %s279
        %v281 = vld [vmem:[%s238] sm:$0xff]
        %vm282 = vcmask 261120
        %v283 = vsel %vm282, %v281, 0.0
        %284 = vadd.xlane.f32.xlu0 %v283
        %v285 = vpop.xlane.xlu0 %284
        %v286 = vrcp.pop 32.0
        %v287 = vmul.f32 %v285, %v286
        %v288 = vsub.f32 %v281, %v287
        %v289 = vmul.f32 %v288, %v288
        %v290 = vsel %vm282, %v289, 0.0
        %291 = vadd.xlane.f32.xlu0 %v290
        %v292 = vpop.xlane.xlu0 %291
        %v293 = vmul.f32 %v292, %v286
        %v294 = vadd.f32 %v293, 1e-06
        %v295 = vrsqrt.pop %v294
        %v296 = vmul.f32 %v288, %v295
        %v297 = vld [vmem:[%s247] sm:$0x3]
        %v298 = vlaneseq
        %v299 = vshrl.u32 %v298, 7
        %v300 = vsub.s32 1, %v299
        %v301 = vrot.slane %v297, %v300
        %v302 = vmul.f32 %v296, %v301
        %v303 = vlaneseq
        %v304 = vshrl.u32 %v303, 7
        %v305 = vsub.s32 0, %v304
        %v306 = vrot.slane %v297, %v305
        %v307 = vadd.f32 %v302, %v306
        %v308 = vld [vmem:[#allocation7] sm:$0xff]
        %v309 = vld [vmem:[#allocation7 + $0x8] sm:$0xff]
        %v310 = vld [vmem:[#allocation7 + $0x10] sm:$0xff]
        %v311 = vld [vmem:[#allocation7 + $0x18] sm:$0xff]
        %v312 = vld [vmem:[%s3] sm:$0x1]
        %v314 = vlaneseq
        %v315 = vshrl.u32 %v314, 7
        %v316 = vsub.s32 0, %v315
        %v317 = vrot.slane %v312, %v316
        %v320 = vsel %vm282, %v307, 0
        %322 = vmatprep.subr.mxu0 0.0
        %323 = vmatpush1.msra.mxu0 %v308
        %324 = vmatprep.subr.mxu0 0.0
        %325 = vmatpush1.msra.mxu0 %v309
        %326 = vmatprep.subr.mxu0 0.0
        %327 = vmatpush1.msra.mxu0 %v310
        %328 = vmatprep.subr.mxu0 0.0
        %329 = vmatpush1.msra.mxu0 %v311
        %330 = vmatprep.subr.mxu0 0.0
        %331 = vmatpush1.msra.mxu0 0.0
        %332 = vmatprep.subr.mxu0 0.0
        %333 = vmatpush1.msra.mxu0 0.0
        %334 = vmatprep.subr.mxu0 0.0
        %335 = vmatpush1.msra.mxu0 0.0
        %336 = vmatprep.subr.mxu0 0.0
        %337 = vmatpush1.msra.mxu0 0.0
        %338 = vmatprep.subr.mxu0 0.0
        %339 = vmatpush1.msra.mxu0 0.0
        %340 = vmatprep.subr.mxu0 0.0
        %341 = vmatpush1.msra.mxu0 0.0
        %342 = vmatprep.subr.mxu0 0.0
        %343 = vmatpush1.msra.mxu0 0.0
        %344 = vmatprep.subr.mxu0 0.0
        %345 = vmatpush1.msra.mxu0 0.0
        %346 = vmatprep.subr.mxu0 0.0
        %347 = vmatpush1.msra.mxu0 0.0
        %348 = vmatprep.subr.mxu0 0.0
        %349 = vmatpush1.msra.mxu0 0.0
        %350 = vmatprep.subr.mxu0 0.0
        %351 = vmatpush1.msra.mxu0 0.0
        %352 = vmatprep.subr.mxu0 0.0
        %353 = vmatpush1.msra.mxu0 0.0
        %354 = vmatprep.subr.mxu0 0.0
        %355 = vmatpush1.msra.mxu0 0.0
        %356 = vmatprep.subr.mxu0 0.0
        %357 = vmatpush1.msra.mxu0 0.0
        %358 = vmatprep.subr.mxu0 0.0
        %359 = vmatpush1.msra.mxu0 0.0
        %360 = vmatprep.subr.mxu0 0.0
        %361 = vmatpush1.msra.mxu0 0.0
        %362 = vmatprep.subr.mxu0 0.0
        %363 = vmatpush1.msra.mxu0 0.0
        %364 = vmatprep.subr.mxu0 0.0
        %365 = vmatpush1.msra.mxu0 0.0
        %366 = vmatprep.subr.mxu0 0.0
        %367 = vmatpush1.msra.mxu0 0.0
        %368 = vmatprep.subr.mxu0 0.0
        %369 = vmatpush1.msra.mxu0 0.0
        %370 = vmatprep.subr.mxu0 0.0
        %371 = vmatpush1.msra.mxu0 0.0
        %372 = vmatprep.subr.mxu0 0.0
        %373 = vmatpush1.msra.mxu0 0.0
        %374 = vmatprep.subr.mxu0 0.0
        %375 = vmatpush1.msra.mxu0 0.0
        %376 = vmatprep.subr.mxu0 0.0
        %377 = vmatpush1.msra.mxu0 0.0
        %378 = vmatprep.subr.mxu0 0.0
        %379 = vmatpush1.msra.mxu0 0.0
        %380 = vmatprep.subr.mxu0 0.0
        %381 = vmatpush1.msra.mxu0 0.0
        %382 = vmatprep.subr.mxu0 0.0
        %383 = vmatpush1.msra.mxu0 0.0
        %384 = vmatprep.subr.mxu0 0.0
        %385 = vmatpush1.msra.mxu0 0.0
        %386 = vmatprep.mubr.f32.mxu0 0.0
        %387 = vmatmul.mubr.f32.gmra.mrb[0].mxu0 %v320
        %v388 = vpop.f32.mrb[0].mxu0
        %v389 = vadd.f32 %v317, %v388
        %v390 = vpop.f32.mrb[0].mxu0
        %391 = vdwg.mxu0
        %392 = vst [vmem:[%s280] sm:$0xff] %v389
        %s393 = sand.u32 %s142, 1
        %s394 = scalar_lea.sflag [#allocation4], %s393
        %s395 = sand.u32 %s142, 1
        %s396 = smul.addr %s395, 8
        %s397 = scalar_lea.vmem [#allocation8], %s396
        // Predicated region
        $region49: #{tpu_custom_call.1} parent=35 // pred_check
          %p398 = pneg %p152
        $region50: #{tpu_custom_call.1} parent=35 // pred_check_branch
          %400 = sbr.rel (%p398) target = $region52
        $region51: #{tpu_custom_call.1} parent=35 // pred_region
          %s402 = ssub.s32 128, 128
          %403 = vsyncadd %s394, %s402
          %s404 = sadd.s32 %s29, %s28
          %s405 = smul.addr %s404, 128
          %s406 = scalar_lea.hbm %s4, %s405
          %s408 = sshll.u32 %s397, 4
          %s409 = int_to_ptr.vmem [resolvable:$true] %s408
          %411 = dma.vmem_to_hbm [thread:$0]  %s409, 128, %s406, %s394
        $region52: #{tpu_custom_call.1} parent=35 // pred_fallthru
          _
      $region36: #{tpu_custom_call.1} parent=5 // pred_fallthru
        _
      %p412 = scmp.le.s32.totalorder 2, %s19
      // Predicated region
      $region53: #{tpu_custom_call.1} parent=5 // pred_check
        %p413 = pneg %p412
      $region54: #{tpu_custom_call.1} parent=5 // pred_check_branch
        %415 = sbr.rel (%p413) target = $region56
      $region55: #{tpu_custom_call.1} parent=5 // pred_region
        %s416 = ssub.s32 %s19, 2
        // Predicated region
        $region57: #{tpu_custom_call.1} parent=55 // pred_check
          %p417 = pneg %p158
        $region58: #{tpu_custom_call.1} parent=55 // pred_check_branch
          %419 = sbr.rel (%p417) target = $region60
        $region59: #{tpu_custom_call.1} parent=55 // pred_region
          %s420 = sand.u32 %s143, 1
          %s421 = scalar_lea.sflag [#allocation4], %s420
          %s422 = sand.u32 %s143, 1
          %s423 = smul.addr %s422, 8
          %s424 = scalar_lea.vmem [#allocation8], %s423
          %425 = dma.done %s421, 128
        $region60: #{tpu_custom_call.1} parent=55 // pred_fallthru
          _
      $region56: #{tpu_custom_call.1} parent=5 // pred_fallthru
        _
    $region6: #{tpu_custom_call.1} parent=1 // loop_footer
      %s23 = sadd.s32 1, %s19
    $region7: #{tpu_custom_call.1} parent=1 // loop_footer_branch
      %18 = sbr.rel target = $region3
    $region8: #{tpu_custom_call.1} parent=1 // loop_exit
      _
    %426 = vsyncpa [#allocation3], 1
    %s427 = scalar_lea.sflag [#allocation3], 1
    %428 = vsyncpa %s427, 1
    %429 = vsyncpa [#allocation6], 1
    %s430 = scalar_lea.sflag [#allocation6], 1
    %431 = vsyncpa %s430, 1
    %432 = vsyncpa [#allocation4], 1
    %s433 = scalar_lea.sflag [#allocation4], 1
    %434 = vsyncpa %s433, 1

</llo_original>
